<compile_context>
chip_gen: v7x
topology: tpu7x:2x2x1
jax: 0.10.0
libtpu: 0.0.40
codegen_flags: <defaults>
</compile_context>

<pallas_src>
import jax
import jax.numpy as jnp
from jax.experimental import pallas as pl
from jax.experimental.pallas import tpu as pltpu

FEAT = 784          # flattened feature count (28*28); NOT padded (full-dim block)
H_PAD = 128         # hidden dim padded to one full lane-vreg
OUT = 10            # real number of classes
OUT_PAD = 128       # lane-dense output block (avoid masked partial stores)
NEG_BIG = -1e30     # "minus infinity" bias for pad class lanes (exp -> 0)


def _round_up(n, m):
    return ((n + m - 1) // m) * m


def _pick_tb(batch, tb_max=2048):
    """Batch tile: one full-batch block for small B, else a multiple of 8 that
    gives >= 2 grid steps (v7x megacore) and caps VMEM (v7x has 64 MiB)."""
    if batch <= 16:
        return batch                      # single block; full-dim exemption from 8-row rule
    half = _round_up(pl.cdiv(batch, 2), 8)
    return max(8, min(tb_max, half))


def simple_fc_kernel(x_ref, w1_ref, b1_ref, w2_ref, b2_ref, out_ref):
    # x_ref: (TB, 784) f32, w1_ref: (784, H_PAD) bf16, b1_ref: (1, H_PAD) f32,
    # w2_ref: (H_PAD, OUT_PAD) f32, b2_ref: (1, OUT_PAD) f32, out_ref: (TB, OUT_PAD) f32
    x = x_ref[...].astype(jnp.bfloat16)                 # cast on the VMEM tile (MXU single pass)
    # dense_1 (bf16 inputs, f32 accumulate) + bias + ReLU
    h = jnp.dot(x, w1_ref[...], preferred_element_type=jnp.float32) + b1_ref[...]
    h = jnp.maximum(h, 0.0)
    # dense_out; pad class lanes carry a -1e30 bias -> softmax weight exactly 0
    logits = jnp.dot(h, w2_ref[...], preferred_element_type=jnp.float32) + b2_ref[...]
    # softmax over the class lanes (max-stabilized), exact divide for row-sum == 1
    m = jnp.max(logits, axis=-1, keepdims=True)
    e = jnp.exp(logits - m)
    denom = jnp.sum(e, axis=-1, keepdims=True)
    out_ref[...] = (e / denom).astype(out_ref.dtype)


def prepare_params(w1, b1, w2, b2):
    """Pad PyTorch-equivalent params to lane-aligned shapes.

    w1: (784, H), b1: (1, H), w2: (H, 10), b2: (1, 10)  (transposed vs torch)
    """
    H = w1.shape[1]
    assert H <= H_PAD, f"num_neurons={H} > {H_PAD} not supported by this kernel"
    w1_p = jnp.zeros((FEAT, H_PAD), jnp.float32).at[:, :H].set(w1).astype(jnp.bfloat16)
    b1_p = jnp.zeros((1, H_PAD), jnp.float32).at[:, :H].set(b1)
    w2_p = jnp.zeros((H_PAD, OUT_PAD), jnp.float32).at[:H, :OUT].set(w2)
    b2_p = jnp.full((1, OUT_PAD), NEG_BIG, jnp.float32).at[:, :OUT].set(b2)
    return w1_p, b1_p, w2_p, b2_p


def simple_fc_forward(x_nchw, w1, b1, w2, b2, tb=2048):
    """x_nchw: [B, 1, 28, 28] float32 -> probabilities [B, 10] float32."""
    B = x_nchw.shape[0]
    x_flat = x_nchw.reshape(B, FEAT)          # same as torch .view(-1, 784); no pad / no cast copy

    TB = _pick_tb(B, tb)
    grid = (pl.cdiv(B, TB),)

    w1_p, b1_p, w2_p, b2_p = prepare_params(w1, b1, w2, b2)

    # Scoped-VMEM budget: double-buffered x/out tiles + per-tile intermediates
    # + resident weights + headroom.  Clamped to [32 MiB, 48 MiB] so v5e's
    # 16 MiB default is raised and v7x's 64 MiB physical VMEM is respected.
    vmem_limit = int(
        2 * TB * FEAT * 4                                   # x tiles (f32, double buffered)
        + 2 * TB * OUT_PAD * 4                              # out tiles (f32, double buffered)
        + TB * (FEAT * 2 + 2 * H_PAD * 4 + 2 * OUT_PAD * 4)  # bf16 x copy, h, logits/e
        + FEAT * H_PAD * 2 + H_PAD * OUT_PAD * 4 + (H_PAD + OUT_PAD) * 4  # resident weights
        + (4 << 20)                                         # headroom
    )
    vmem_limit = min(max(vmem_limit, 32 << 20), 48 << 20)

    out = pl.pallas_call(
        simple_fc_kernel,
        out_shape=jax.ShapeDtypeStruct((grid[0] * TB, OUT_PAD), jnp.float32),
        grid=grid,
        in_specs=[
            pl.BlockSpec((TB, FEAT), lambda i: (i, 0)),       # x tile (pipelined; ragged tail ok)
            pl.BlockSpec((FEAT, H_PAD), lambda i: (0, 0)),    # w1 (resident)
            pl.BlockSpec((1, H_PAD), lambda i: (0, 0)),       # b1 (resident)
            pl.BlockSpec((H_PAD, OUT_PAD), lambda i: (0, 0)), # w2 (resident)
            pl.BlockSpec((1, OUT_PAD), lambda i: (0, 0)),     # b2 (resident)
        ],
        out_specs=pl.BlockSpec((TB, OUT_PAD), lambda i: (i, 0)),
        compiler_params=pltpu.CompilerParams(
            dimension_semantics=("parallel",),   # megacore sharding on v7x
            vmem_limit_bytes=vmem_limit,
        ),
    )(x_flat, w1_p, b1_p, w2_p, b2_p)

    return out[:B, :OUT]


def init_params(key, num_neurons=5):
    """Deterministic init mimicking nn.Linear default (uniform +/- 1/sqrt(fan_in))."""
    k1, k2, k3, k4 = jax.random.split(key, 4)
    bound1 = 1.0 / jnp.sqrt(784.0)
    bound2 = 1.0 / jnp.sqrt(float(num_neurons))
    w1 = jax.random.uniform(k1, (784, num_neurons), jnp.float32, -bound1, bound1)
    b1 = jax.random.uniform(k2, (1, num_neurons), jnp.float32, -bound1, bound1)
    w2 = jax.random.uniform(k3, (num_neurons, 10), jnp.float32, -bound2, bound2)
    b2 = jax.random.uniform(k4, (1, 10), jnp.float32, -bound2, bound2)
    return w1, b1, w2, b2


if __name__ == "__main__":
    key = jax.random.PRNGKey(0)
    k_x, k_p = jax.random.split(key)

    num_neurons = 5
    batch = 2
    # Input consistent with the module: anything flattening to 784 features.
    x = jax.random.normal(k_x, (batch, 1, 28, 28), dtype=jnp.float32)

    w1, b1, w2, b2 = init_params(k_p, num_neurons)

    probs = simple_fc_forward(x, w1, b1, w2, b2)
    probs = jax.block_until_ready(probs)

    # Reference check in plain JAX (f32 everywhere).
    x_flat = x.reshape(batch, 784)
    h_ref = jnp.maximum(x_flat @ w1 + b1, 0.0)
    ref = jax.nn.softmax(h_ref @ w2 + b2, axis=1)

    row_sums = jnp.sum(probs, axis=1)
    assert probs.shape == (batch, 10)
    assert bool(jnp.all(jnp.abs(row_sums - 1.0) < 1e-3))      # exact divide -> ~f32 eps
    assert bool(jnp.max(jnp.abs(probs - ref)) < 5e-3)         # bf16 first matmul

    print("KERNEL_OK")
</pallas_src>

<mosaic_0001>
module attributes {stable_mosaic.version = 11 : i64} {
  func.func @simple_fc_kernel(%arg0: i32, %arg1: memref<2x784xf32, #tpu.memory_space<vmem>>, %arg2: memref<784x128xbf16, #tpu.memory_space<vmem>>, %arg3: memref<1x128xf32, #tpu.memory_space<vmem>>, %arg4: memref<128x128xf32, #tpu.memory_space<vmem>>, %arg5: memref<1x128xf32, #tpu.memory_space<vmem>>, %arg6: memref<2x128xf32, #tpu.memory_space<vmem>>) attributes {dimension_semantics = [#tpu.dimension_semantics<parallel>], iteration_bounds = array<i64: 1>, scalar_prefetch = 0 : i64, scratch_operands = 0 : i64, tpu.core_type = #tpu.core_type<tc>, window_params = [{transform_indices = @transform_0, window_bounds = array<i64: 2, 784>}, {pipeline_mode = #tpu.pipeline_mode<synchronous>, transform_indices = @transform_1, window_bounds = array<i64: 784, 128>}, {pipeline_mode = #tpu.pipeline_mode<synchronous>, transform_indices = @transform_2, window_bounds = array<i64: 1, 128>}, {pipeline_mode = #tpu.pipeline_mode<synchronous>, transform_indices = @transform_3, window_bounds = array<i64: 128, 128>}, {pipeline_mode = #tpu.pipeline_mode<synchronous>, transform_indices = @transform_4, window_bounds = array<i64: 1, 128>}, {transform_indices = @transform_5, window_bounds = array<i64: 2, 128>}]} {
    %c0 = arith.constant 0 : index
    %c0_0 = arith.constant 0 : index
    %0 = vector.load %arg1[%c0, %c0_0] : memref<2x784xf32, #tpu.memory_space<vmem>>, vector<2x784xf32>
    %1 = arith.truncf %0 : vector<2x784xf32> to vector<2x784xbf16>
    %c0_1 = arith.constant 0 : index
    %c0_2 = arith.constant 0 : index
    %2 = vector.load %arg2[%c0_1, %c0_2] : memref<784x128xbf16, #tpu.memory_space<vmem>>, vector<784x128xbf16>
    %cst = arith.constant dense<0.000000e+00> : vector<2x128xf32>
    %3 = tpu.matmul %1, %2, %cst {dimension_numbers = #tpu.dot_dimension_numbers<[1], [0], [0], [1], [0, 0, 1, 1], [], []>} : vector<2x784xbf16>, vector<784x128xbf16>, vector<2x128xf32> -> vector<2x128xf32>
    %c0_3 = arith.constant 0 : index
    %c0_4 = arith.constant 0 : index
    %4 = vector.load %arg3[%c0_3, %c0_4] : memref<1x128xf32, #tpu.memory_space<vmem>>, vector<1x128xf32>
    %5 = vector.broadcast %4 : vector<1x128xf32> to vector<2x128xf32>
    %6 = arith.addf %3, %5 : vector<2x128xf32>
    %cst_5 = arith.constant 0.000000e+00 : f32
    %7 = vector.broadcast %cst_5 : f32 to vector<2x128xf32>
    %8 = arith.maximumf %6, %7 : vector<2x128xf32>
    %c0_6 = arith.constant 0 : index
    %c0_7 = arith.constant 0 : index
    %9 = vector.load %arg4[%c0_6, %c0_7] : memref<128x128xf32, #tpu.memory_space<vmem>>, vector<128x128xf32>
    %cst_8 = arith.constant dense<0.000000e+00> : vector<2x128xf32>
    %10 = tpu.matmul %8, %9, %cst_8 {dimension_numbers = #tpu.dot_dimension_numbers<[1], [0], [0], [1], [0, 0, 1, 1], [], []>} : vector<2x128xf32>, vector<128x128xf32>, vector<2x128xf32> -> vector<2x128xf32>
    %c0_9 = arith.constant 0 : index
    %c0_10 = arith.constant 0 : index
    %11 = vector.load %arg5[%c0_9, %c0_10] : memref<1x128xf32, #tpu.memory_space<vmem>>, vector<1x128xf32>
    %12 = vector.broadcast %11 : vector<1x128xf32> to vector<2x128xf32>
    %13 = arith.addf %10, %12 : vector<2x128xf32>
    %cst_11 = arith.constant dense<0xFF800000> : vector<2xf32>
    %14 = vector.multi_reduction <maximumf>, %13, %cst_11 [1] : vector<2x128xf32> to vector<2xf32>
    %15 = vector.shape_cast %14 : vector<2xf32> to vector<2x1xf32>
    %16 = vector.broadcast %15 : vector<2x1xf32> to vector<2x128xf32>
    %17 = arith.subf %13, %16 : vector<2x128xf32>
    %18 = math.exp %17 : vector<2x128xf32>
    %cst_12 = arith.constant dense<0.000000e+00> : vector<2xf32>
    %19 = vector.multi_reduction <add>, %18, %cst_12 [1] : vector<2x128xf32> to vector<2xf32>
    %20 = vector.shape_cast %19 : vector<2xf32> to vector<2x1xf32>
    %21 = vector.broadcast %20 : vector<2x1xf32> to vector<2x128xf32>
    %22 = arith.divf %18, %21 : vector<2x128xf32>
    %c0_13 = arith.constant 0 : index
    %c0_14 = arith.constant 0 : index
    %23 = vector.load %arg6[%c0_13, %c0_14] : memref<2x128xf32, #tpu.memory_space<vmem>>, vector<2x128xf32>
    tpu.vector_store %arg6[%c0_13, %c0_14], %22 {strides = array<i32>} : memref<2x128xf32, #tpu.memory_space<vmem>>, vector<2x128xf32>,
    return
  }
  func.func @transform_0(%arg0: i32) -> (i32, i32) {
    %c0_i32 = arith.constant 0 : i32
    %c0_i32_0 = arith.constant 0 : i32
    return %arg0, %c0_i32 : i32, i32
  }
  func.func @transform_1(%arg0: i32) -> (i32, i32) {
    %c0_i32 = arith.constant 0 : i32
    %c0_i32_0 = arith.constant 0 : i32
    %c0_i32_1 = arith.constant 0 : i32
    return %c0_i32, %c0_i32_0 : i32, i32
  }
  func.func @transform_2(%arg0: i32) -> (i32, i32) {
    %c0_i32 = arith.constant 0 : i32
    %c0_i32_0 = arith.constant 0 : i32
    %c0_i32_1 = arith.constant 0 : i32
    return %c0_i32, %c0_i32_0 : i32, i32
  }
  func.func @transform_3(%arg0: i32) -> (i32, i32) {
    %c0_i32 = arith.constant 0 : i32
    %c0_i32_0 = arith.constant 0 : i32
    %c0_i32_1 = arith.constant 0 : i32
    return %c0_i32, %c0_i32_0 : i32, i32
  }
  func.func @transform_4(%arg0: i32) -> (i32, i32) {
    %c0_i32 = arith.constant 0 : i32
    %c0_i32_0 = arith.constant 0 : i32
    %c0_i32_1 = arith.constant 0 : i32
    return %c0_i32, %c0_i32_0 : i32, i32
  }
  func.func @transform_5(%arg0: i32) -> (i32, i32) {
    %c0_i32 = arith.constant 0 : i32
    %c0_i32_0 = arith.constant 0 : i32
    return %arg0, %c0_i32 : i32, i32
  }
}

</mosaic_0001>

<llo_original>
// kernel: tpu_custom_call.1
$region0: #{tpu_custom_call.1}
  #allocation0 [shape = 'u32[]', space=smem, size = 0x4, offset = 0x4, fixed_abs, tag = 'smem constant byte address 0x4 - core index']
  #allocation1 [shape = 'u32[144,128]{1,0:T(1,128)}', space=vmem, size = 0x12000, scoped, tag = 'internal scratch']
  %s0 = inlined_call_operand.hbm [shape: f32[2,784], index: 0, kind: input, shape index: {}]
  %s1 = inlined_call_operand.hbm [shape: bf16[784,128], index: 1, kind: input, shape index: {}]
  %s2 = inlined_call_operand.vmem [shape: f32[1,128], index: 2, kind: input, shape index: {}]
  %s3 = inlined_call_operand.hbm [shape: f32[128,128], index: 3, kind: input, shape index: {}]
  %s4 = inlined_call_operand.vmem [shape: f32[1,128], index: 4, kind: input, shape index: {}]
  %s5 = inlined_call_operand.hbm [shape: f32[2,128], index: 5, kind: output, shape index: {}]
  %s6 = sld [smem:[#allocation0]]
  $region42: #{tpu_custom_call.1} parent=0
    _
  %s8 = ssub.s32 1, %s6
  %s9 = scalar_select 0, %s8, %s6
  $region1: #{tpu_custom_call.1} parent=0
    #allocation2 [shape = 'u8[7168]{0}', space=vmem, size = 0x1c00, scoped, tag = 'input window, operand 0, single buffered']
    #allocation3 [shape = 's32[1]{0}', space=sflag, size = 0x4, scoped, tag = 'scoped memory for tpu_custom_call.1']
    #allocation4 [shape = 's32[1]{0}', space=sflag, size = 0x4, scoped, tag = 'scoped memory for tpu_custom_call.1']
    #allocation5 [shape = 'u8[200704]{0}', space=vmem, size = 0x31000, scoped, tag = 'input window, operand 1, single buffered']
    #allocation6 [shape = 's32[1]{0}', space=sflag, size = 0x4, scoped, tag = 'scoped memory for tpu_custom_call.1']
    #allocation7 [shape = 'u8[65536]{0}', space=vmem, size = 0x10000, scoped, tag = 'input window, operand 3, single buffered']
    #allocation8 [shape = 'u8[1024]{0}', space=vmem, size = 0x400, scoped, tag = 'output window, operand 0, single buffered']
    %10 = vsyncpa [#allocation3], 0
    %11 = vsyncpa [#allocation6], 0
    %12 = vsyncpa [#allocation4], 0
    // Predicated region
    $region2: #{tpu_custom_call.1} parent=1 // pred_check
      _
    $region3: #{tpu_custom_call.1} parent=1 // pred_check_branch
      %14 = sbr.rel (0) target = $region5
    $region4: #{tpu_custom_call.1} parent=1 // pred_region
      %s16 = ssub.s32 224, 224
      %17 = vsyncadd [#allocation3], %s16
      %s19 = sshll.u32 [#allocation2], 4
      %s20 = int_to_ptr.vmem [resolvable:$true] %s19
      %22 = dma.hbm_to_vmem [thread:$0]  %s0, 224, %s20, [#allocation3]
    $region5: #{tpu_custom_call.1} parent=1 // pred_fallthru
      _
    // Predicated region
    $region6: #{tpu_custom_call.1} parent=1 // pred_check
      _
    $region7: #{tpu_custom_call.1} parent=1 // pred_check_branch
      %24 = sbr.rel (0) target = $region9
    $region8: #{tpu_custom_call.1} parent=1 // pred_region
      %s26 = ssub.s32 6272, 6272
      %27 = vsyncadd [#allocation6], %s26
      %s28 = sshll.u32 [#allocation5], 4
      %s29 = int_to_ptr.vmem [resolvable:$true] %s28
      %34 = dma.hbm_to_vmem [thread:$0]  %s1, 6272, %s29, [#allocation6], 64, 64, 4
    $region9: #{tpu_custom_call.1} parent=1 // pred_fallthru
      _
    // Predicated region
    $region10: #{tpu_custom_call.1} parent=1 // pred_check
      _
    $region11: #{tpu_custom_call.1} parent=1 // pred_check_branch
      %36 = sbr.rel (0) target = $region13
    $region12: #{tpu_custom_call.1} parent=1 // pred_region
      _
    $region13: #{tpu_custom_call.1} parent=1 // pred_fallthru
      _
    // Predicated region
    $region14: #{tpu_custom_call.1} parent=1 // pred_check
      _
    $region15: #{tpu_custom_call.1} parent=1 // pred_check_branch
      %38 = sbr.rel (0) target = $region17
    $region16: #{tpu_custom_call.1} parent=1 // pred_region
      %s40 = ssub.s32 2048, 2048
      %41 = vsyncadd [#allocation6], %s40
      %s42 = sshll.u32 [#allocation7], 4
      %s43 = int_to_ptr.vmem [resolvable:$true] %s42
      %48 = dma.hbm_to_vmem [thread:$0]  %s3, 2048, %s43, [#allocation6], 128, 128, 8
    $region17: #{tpu_custom_call.1} parent=1 // pred_fallthru
      _
    // Predicated region
    $region18: #{tpu_custom_call.1} parent=1 // pred_check
      _
    $region19: #{tpu_custom_call.1} parent=1 // pred_check_branch
      %50 = sbr.rel (0) target = $region21
    $region20: #{tpu_custom_call.1} parent=1 // pred_region
      _
    $region21: #{tpu_custom_call.1} parent=1 // pred_fallthru
      _
    // Predicated region
    $region22: #{tpu_custom_call.1} parent=1 // pred_check
      _
    $region23: #{tpu_custom_call.1} parent=1 // pred_check_branch
      %52 = sbr.rel (0) target = $region25
    $region24: #{tpu_custom_call.1} parent=1 // pred_region
      %53 = dma.done [#allocation3], 224
    $region25: #{tpu_custom_call.1} parent=1 // pred_fallthru
      _
    // Predicated region
    $region26: #{tpu_custom_call.1} parent=1 // pred_check
      _
    $region27: #{tpu_custom_call.1} parent=1 // pred_check_branch
      %55 = sbr.rel (0) target = $region29
    $region28: #{tpu_custom_call.1} parent=1 // pred_region
      %56 = dma.done [#allocation6], 6272
    $region29: #{tpu_custom_call.1} parent=1 // pred_fallthru
      _
    // Predicated region
    $region30: #{tpu_custom_call.1} parent=1 // pred_check
      _
    $region31: #{tpu_custom_call.1} parent=1 // pred_check_branch
      %58 = sbr.rel (0) target = $region33
    $region32: #{tpu_custom_call.1} parent=1 // pred_region
      %59 = dma.done [#allocation6], 2048
    $region33: #{tpu_custom_call.1} parent=1 // pred_fallthru
      _
    %v61 = vld [vmem:[#allocation2] sm:$0xff]
    %v62 = vld [vmem:[#allocation2 + $0x8] sm:$0x3f]
    %v65 = vcombine.high %v61, %v61
    %v67 = vunpack.c.l.s4 1983009808
    %v68 = vunpack.c.0.s8 %v67
    %v69 = vlaneseq
    %v70 = vshrl.u32 %v69, 7
    %v71 = vsub.s32 %v68, %v70
    %v72 = vrot.slane %v61, %v71
    %v74 = vunpack.c.l.s4 1983009808
    %v75 = vunpack.c.0.s8 %v74
    %v76 = vlaneseq
    %v77 = vshrl.u32 %v76, 7
    %v78 = vsub.s32 %v75, %v77
    %v79 = vrot.slane %v65, %v78
    %v80 = vcombine.high %v72, %v72
    %v81 = vcombine.high %v79, %v79
    %v82 = vcombine.high %v62, %v62
    %v84 = vunpack.c.l.s4 1983009808
    %v85 = vunpack.c.0.s8 %v84
    %v86 = vlaneseq
    %v87 = vshrl.u32 %v86, 7
    %v88 = vsub.s32 %v85, %v87
    %v89 = vrot.slane %v62, %v88
    %v91 = vunpack.c.l.s4 1983009808
    %v92 = vunpack.c.0.s8 %v91
    %v93 = vlaneseq
    %v94 = vshrl.u32 %v93, 7
    %v95 = vsub.s32 %v92, %v94
    %v96 = vrot.slane %v82, %v95
    %v97 = vcombine.high %v89, %v89
    %v105 = vpack.c.bf16 %v72, %v72
    %v106 = vpack.c.bf16 %v80, %v80
    %v107 = vpack.c.bf16 %v79, %v79
    %v108 = vpack.c.bf16 %v81, %v81
    %v109 = vpack.c.bf16 %v89, %v89
    %v110 = vpack.c.bf16 %v97, %v97
    %v111 = vpack.c.bf16 %v96, %v96
    %v112 = vld [vmem:[#allocation5] sm:$0xf]
    %v113 = vld [vmem:[#allocation5 + $0x4] sm:$0xf]
    %v114 = vld [vmem:[#allocation5 + $0x8] sm:$0xf]
    %v115 = vld [vmem:[#allocation5 + $0xc] sm:$0xf]
    %v116 = vld [vmem:[#allocation5 + $0x10] sm:$0xf]
    %v117 = vld [vmem:[#allocation5 + $0x14] sm:$0xf]
    %v118 = vld [vmem:[#allocation5 + $0x18] sm:$0xf]
    %v119 = vld [vmem:[#allocation5 + $0x1c] sm:$0xf]
    %v120 = vld [vmem:[#allocation5 + $0x20] sm:$0xf]
    %v121 = vld [vmem:[#allocation5 + $0x24] sm:$0xf]
    %v122 = vld [vmem:[#allocation5 + $0x28] sm:$0xf]
    %v123 = vld [vmem:[#allocation5 + $0x2c] sm:$0xf]
    %v124 = vld [vmem:[#allocation5 + $0x30] sm:$0xf]
    %v125 = vld [vmem:[#allocation5 + $0x34] sm:$0xf]
    %v126 = vld [vmem:[#allocation5 + $0x38] sm:$0xf]
    %v127 = vld [vmem:[#allocation5 + $0x3c] sm:$0xf]
    %v128 = vld [vmem:[#allocation5 + $0x40] sm:$0xf]
    %v129 = vld [vmem:[#allocation5 + $0x44] sm:$0xf]
    %v130 = vld [vmem:[#allocation5 + $0x48] sm:$0xf]
    %v131 = vld [vmem:[#allocation5 + $0x4c] sm:$0xf]
    %v132 = vld [vmem:[#allocation5 + $0x50] sm:$0xf]
    %v133 = vld [vmem:[#allocation5 + $0x54] sm:$0xf]
    %v134 = vld [vmem:[#allocation5 + $0x58] sm:$0xf]
    %v135 = vld [vmem:[#allocation5 + $0x5c] sm:$0xf]
    %v136 = vld [vmem:[#allocation5 + $0x60] sm:$0xf]
    %v137 = vld [vmem:[#allocation5 + $0x64] sm:$0xf]
    %v138 = vld [vmem:[#allocation5 + $0x68] sm:$0xf]
    %v139 = vld [vmem:[#allocation5 + $0x6c] sm:$0xf]
    %v140 = vld [vmem:[#allocation5 + $0x70] sm:$0xf]
    %v141 = vld [vmem:[#allocation5 + $0x74] sm:$0xf]
    %v142 = vld [vmem:[#allocation5 + $0x78] sm:$0xf]
    %v143 = vld [vmem:[#allocation5 + $0x7c] sm:$0xf]
    %v144 = vld [vmem:[#allocation5 + $0x80] sm:$0xf]
    %v145 = vld [vmem:[#allocation5 + $0x84] sm:$0xf]
    %v146 = vld [vmem:[#allocation5 + $0x88] sm:$0xf]
    %v147 = vld [vmem:[#allocation5 + $0x8c] sm:$0xf]
    %v148 = vld [vmem:[#allocation5 + $0x90] sm:$0xf]
    %v149 = vld [vmem:[#allocation5 + $0x94] sm:$0xf]
    %v150 = vld [vmem:[#allocation5 + $0x98] sm:$0xf]
    %v151 = vld [vmem:[#allocation5 + $0x9c] sm:$0xf]
    %v152 = vld [vmem:[#allocation5 + $0xa0] sm:$0xf]
    %v153 = vld [vmem:[#allocation5 + $0xa4] sm:$0xf]
    %v154 = vld [vmem:[#allocation5 + $0xa8] sm:$0xf]
    %v155 = vld [vmem:[#allocation5 + $0xac] sm:$0xf]
    %v156 = vld [vmem:[#allocation5 + $0xb0] sm:$0xf]
    %v157 = vld [vmem:[#allocation5 + $0xb4] sm:$0xf]
    %v158 = vld [vmem:[#allocation5 + $0xb8] sm:$0xf]
    %v159 = vld [vmem:[#allocation5 + $0xbc] sm:$0xf]
    %v160 = vld [vmem:[#allocation5 + $0xc0] sm:$0xf]
    %v161 = vld [vmem:[#allocation5 + $0xc4] sm:$0xf]
    %v162 = vld [vmem:[#allocation5 + $0xc8] sm:$0xf]
    %v163 = vld [vmem:[#allocation5 + $0xcc] sm:$0xf]
    %v164 = vld [vmem:[#allocation5 + $0xd0] sm:$0xf]
    %v165 = vld [vmem:[#allocation5 + $0xd4] sm:$0xf]
    %v166 = vld [vmem:[#allocation5 + $0xd8] sm:$0xf]
    %v167 = vld [vmem:[#allocation5 + $0xdc] sm:$0xf]
    %v168 = vld [vmem:[#allocation5 + $0xe0] sm:$0xf]
    %v169 = vld [vmem:[#allocation5 + $0xe4] sm:$0xf]
    %v170 = vld [vmem:[#allocation5 + $0xe8] sm:$0xf]
    %v171 = vld [vmem:[#allocation5 + $0xec] sm:$0xf]
    %v172 = vld [vmem:[#allocation5 + $0xf0] sm:$0xf]
    %v173 = vld [vmem:[#allocation5 + $0xf4] sm:$0xf]
    %v174 = vld [vmem:[#allocation5 + $0xf8] sm:$0xf]
    %v175 = vld [vmem:[#allocation5 + $0xfc] sm:$0xf]
    %v176 = vld [vmem:[#allocation5 + $0x100] sm:$0xf]
    %v177 = vld [vmem:[#allocation5 + $0x104] sm:$0xf]
    %v178 = vld [vmem:[#allocation5 + $0x108] sm:$0xf]
    %v179 = vld [vmem:[#allocation5 + $0x10c] sm:$0xf]
    %v180 = vld [vmem:[#allocation5 + $0x110] sm:$0xf]
    %v181 = vld [vmem:[#allocation5 + $0x114] sm:$0xf]
    %v182 = vld [vmem:[#allocation5 + $0x118] sm:$0xf]
    %v183 = vld [vmem:[#allocation5 + $0x11c] sm:$0xf]
    %v184 = vld [vmem:[#allocation5 + $0x120] sm:$0xf]
    %v185 = vld [vmem:[#allocation5 + $0x124] sm:$0xf]
    %v186 = vld [vmem:[#allocation5 + $0x128] sm:$0xf]
    %v187 = vld [vmem:[#allocation5 + $0x12c] sm:$0xf]
    %v188 = vld [vmem:[#allocation5 + $0x130] sm:$0xf]
    %v189 = vld [vmem:[#allocation5 + $0x134] sm:$0xf]
    %v190 = vld [vmem:[#allocation5 + $0x138] sm:$0xf]
    %v191 = vld [vmem:[#allocation5 + $0x13c] sm:$0xf]
    %v192 = vld [vmem:[#allocation5 + $0x140] sm:$0xf]
    %v193 = vld [vmem:[#allocation5 + $0x144] sm:$0xf]
    %v194 = vld [vmem:[#allocation5 + $0x148] sm:$0xf]
    %v195 = vld [vmem:[#allocation5 + $0x14c] sm:$0xf]
    %v196 = vld [vmem:[#allocation5 + $0x150] sm:$0xf]
    %v197 = vld [vmem:[#allocation5 + $0x154] sm:$0xf]
    %v198 = vld [vmem:[#allocation5 + $0x158] sm:$0xf]
    %v199 = vld [vmem:[#allocation5 + $0x15c] sm:$0xf]
    %v200 = vld [vmem:[#allocation5 + $0x160] sm:$0xf]
    %v201 = vld [vmem:[#allocation5 + $0x164] sm:$0xf]
    %v202 = vld [vmem:[#allocation5 + $0x168] sm:$0xf]
    %v203 = vld [vmem:[#allocation5 + $0x16c] sm:$0xf]
    %v204 = vld [vmem:[#allocation5 + $0x170] sm:$0xf]
    %v205 = vld [vmem:[#allocation5 + $0x174] sm:$0xf]
    %v206 = vld [vmem:[#allocation5 + $0x178] sm:$0xf]
    %v207 = vld [vmem:[#allocation5 + $0x17c] sm:$0xf]
    %v208 = vld [vmem:[#allocation5 + $0x180] sm:$0xf]
    %v209 = vld [vmem:[#allocation5 + $0x184] sm:$0xf]
    %v210 = vld [vmem:[%s2] sm:$0x1]
    %v212 = vlaneseq
    %v213 = vshrl.u32 %v212, 7
    %v214 = vsub.s32 0, %v213
    %v215 = vrot.slane %v210, %v214
    %v315 = vunpack.c.l.b16 %v112
    %v316 = vunpack.c.l.b16 %v113
    %v317 = vunpack.c.l.b16 %v114
    %v318 = vunpack.c.l.b16 %v115
    %v319 = vunpack.c.l.b16 %v116
    %v320 = vunpack.c.l.b16 %v117
    %v321 = vunpack.c.l.b16 %v118
    %v322 = vunpack.c.l.b16 %v119
    %v323 = vunpack.c.l.b16 %v120
    %v324 = vunpack.c.l.b16 %v121
    %v325 = vunpack.c.l.b16 %v122
    %v326 = vunpack.c.l.b16 %v123
    %v327 = vunpack.c.l.b16 %v124
    %v328 = vunpack.c.l.b16 %v125
    %v329 = vunpack.c.l.b16 %v126
    %v330 = vunpack.c.l.b16 %v127
    %v331 = vunpack.c.l.b16 %v128
    %v332 = vunpack.c.l.b16 %v129
    %v333 = vunpack.c.l.b16 %v130
    %v334 = vunpack.c.l.b16 %v131
    %v335 = vunpack.c.l.b16 %v132
    %v336 = vunpack.c.l.b16 %v133
    %v337 = vunpack.c.l.b16 %v134
    %v338 = vunpack.c.l.b16 %v135
    %v339 = vunpack.c.l.b16 %v136
    %v340 = vunpack.c.l.b16 %v137
    %v341 = vunpack.c.l.b16 %v138
    %v342 = vunpack.c.l.b16 %v139
    %v343 = vunpack.c.l.b16 %v140
    %v344 = vunpack.c.l.b16 %v141
    %v345 = vunpack.c.l.b16 %v142
    %v346 = vunpack.c.l.b16 %v143
    %v347 = vunpack.c.l.b16 %v144
    %v348 = vunpack.c.l.b16 %v145
    %v349 = vunpack.c.l.b16 %v146
    %v350 = vunpack.c.l.b16 %v147
    %v351 = vunpack.c.l.b16 %v148
    %v352 = vunpack.c.l.b16 %v149
    %v353 = vunpack.c.l.b16 %v150
    %v354 = vunpack.c.l.b16 %v151
    %v355 = vunpack.c.l.b16 %v152
    %v356 = vunpack.c.l.b16 %v153
    %v357 = vunpack.c.l.b16 %v154
    %v358 = vunpack.c.l.b16 %v155
    %v359 = vunpack.c.l.b16 %v156
    %v360 = vunpack.c.l.b16 %v157
    %v361 = vunpack.c.l.b16 %v158
    %v362 = vunpack.c.l.b16 %v159
    %v363 = vunpack.c.l.b16 %v160
    %v364 = vunpack.c.l.b16 %v161
    %v365 = vunpack.c.l.b16 %v162
    %v366 = vunpack.c.l.b16 %v163
    %v367 = vunpack.c.l.b16 %v164
    %v368 = vunpack.c.l.b16 %v165
    %v369 = vunpack.c.l.b16 %v166
    %v370 = vunpack.c.l.b16 %v167
    %v371 = vunpack.c.l.b16 %v168
    %v372 = vunpack.c.l.b16 %v169
    %v373 = vunpack.c.l.b16 %v170
    %v374 = vunpack.c.l.b16 %v171
    %v375 = vunpack.c.l.b16 %v172
    %v376 = vunpack.c.l.b16 %v173
    %v377 = vunpack.c.l.b16 %v174
    %v378 = vunpack.c.l.b16 %v175
    %v379 = vunpack.c.l.b16 %v176
    %v380 = vunpack.c.l.b16 %v177
    %v381 = vunpack.c.l.b16 %v178
    %v382 = vunpack.c.l.b16 %v179
    %v383 = vunpack.c.l.b16 %v180
    %v384 = vunpack.c.l.b16 %v181
    %v385 = vunpack.c.l.b16 %v182
    %v386 = vunpack.c.l.b16 %v183
    %v387 = vunpack.c.l.b16 %v184
    %v388 = vunpack.c.l.b16 %v185
    %v389 = vunpack.c.l.b16 %v186
    %v390 = vunpack.c.l.b16 %v187
    %v391 = vunpack.c.l.b16 %v188
    %v392 = vunpack.c.l.b16 %v189
    %v393 = vunpack.c.l.b16 %v190
    %v394 = vunpack.c.l.b16 %v191
    %v395 = vunpack.c.l.b16 %v192
    %v396 = vunpack.c.l.b16 %v193
    %v397 = vunpack.c.l.b16 %v194
    %v398 = vunpack.c.l.b16 %v195
    %v399 = vunpack.c.l.b16 %v196
    %v400 = vunpack.c.l.b16 %v197
    %v401 = vunpack.c.l.b16 %v198
    %v402 = vunpack.c.l.b16 %v199
    %v403 = vunpack.c.l.b16 %v200
    %v404 = vunpack.c.l.b16 %v201
    %v405 = vunpack.c.l.b16 %v202
    %v406 = vunpack.c.l.b16 %v203
    %v407 = vunpack.c.l.b16 %v204
    %v408 = vunpack.c.l.b16 %v205
    %v409 = vunpack.c.l.b16 %v206
    %v410 = vunpack.c.l.b16 %v207
    %v411 = vunpack.c.l.b16 %v208
    %v412 = vunpack.c.l.b16 %v209
    %v413 = vpack.c.b16 %v316, %v315
    %v414 = vpack.c.b16 %v318, %v317
    %v415 = vpack.c.b16 %v320, %v319
    %v416 = vpack.c.b16 %v322, %v321
    %v417 = vpack.c.b16 %v324, %v323
    %v418 = vpack.c.b16 %v326, %v325
    %v419 = vpack.c.b16 %v328, %v327
    %v420 = vpack.c.b16 %v330, %v329
    %v421 = vpack.c.b16 %v332, %v331
    %v422 = vpack.c.b16 %v334, %v333
    %v423 = vpack.c.b16 %v336, %v335
    %v424 = vpack.c.b16 %v338, %v337
    %v425 = vpack.c.b16 %v340, %v339
    %v426 = vpack.c.b16 %v342, %v341
    %v427 = vpack.c.b16 %v344, %v343
    %v428 = vpack.c.b16 %v346, %v345
    %v429 = vpack.c.b16 %v348, %v347
    %v430 = vpack.c.b16 %v350, %v349
    %v431 = vpack.c.b16 %v352, %v351
    %v432 = vpack.c.b16 %v354, %v353
    %v433 = vpack.c.b16 %v356, %v355
    %v434 = vpack.c.b16 %v358, %v357
    %v435 = vpack.c.b16 %v360, %v359
    %v436 = vpack.c.b16 %v362, %v361
    %v437 = vpack.c.b16 %v364, %v363
    %v438 = vpack.c.b16 %v366, %v365
    %v439 = vpack.c.b16 %v368, %v367
    %v440 = vpack.c.b16 %v370, %v369
    %v441 = vpack.c.b16 %v372, %v371
    %v442 = vpack.c.b16 %v374, %v373
    %v443 = vpack.c.b16 %v376, %v375
    %v444 = vpack.c.b16 %v378, %v377
    %v445 = vpack.c.b16 %v380, %v379
    %v446 = vpack.c.b16 %v382, %v381
    %v447 = vpack.c.b16 %v384, %v383
    %v448 = vpack.c.b16 %v386, %v385
    %v449 = vpack.c.b16 %v388, %v387
    %v450 = vpack.c.b16 %v390, %v389
    %v451 = vpack.c.b16 %v392, %v391
    %v452 = vpack.c.b16 %v394, %v393
    %v453 = vpack.c.b16 %v396, %v395
    %v454 = vpack.c.b16 %v398, %v397
    %v455 = vpack.c.b16 %v400, %v399
    %v456 = vpack.c.b16 %v402, %v401
    %v457 = vpack.c.b16 %v404, %v403
    %v458 = vpack.c.b16 %v406, %v405
    %v459 = vpack.c.b16 %v408, %v407
    %v460 = vpack.c.b16 %v410, %v409
    %v461 = vpack.c.b16 %v412, %v411
    %vm511 = vcmask 130048
    %v513 = vsel %vm511, %v111, 0
    %515 = vmatprep.subr.bf16.mxu0 0
    %516 = vmatpush1.bf16.msra.mxu0 %v413
    %517 = vmatprep.subr.bf16.mxu0 0
    %518 = vmatpush1.bf16.msra.mxu0 %v414
    %519 = vmatprep.subr.bf16.mxu0 0
    %520 = vmatpush1.bf16.msra.mxu0 %v415
    %521 = vmatprep.subr.bf16.mxu0 0
    %522 = vmatpush1.bf16.msra.mxu0 %v416
    %523 = vmatprep.subr.bf16.mxu0 0
    %524 = vmatpush1.bf16.msra.mxu0 %v417
    %525 = vmatprep.subr.bf16.mxu0 0
    %526 = vmatpush1.bf16.msra.mxu0 %v418
    %527 = vmatprep.subr.bf16.mxu0 0
    %528 = vmatpush1.bf16.msra.mxu0 %v419
    %529 = vmatprep.subr.bf16.mxu0 0
    %530 = vmatpush1.bf16.msra.mxu0 %v420
    %531 = vmatprep.subr.bf16.mxu0 0
    %532 = vmatpush1.bf16.msra.mxu0 %v421
    %533 = vmatprep.subr.bf16.mxu0 0
    %534 = vmatpush1.bf16.msra.mxu0 %v422
    %535 = vmatprep.subr.bf16.mxu0 0
    %536 = vmatpush1.bf16.msra.mxu0 %v423
    %537 = vmatprep.subr.bf16.mxu0 0
    %538 = vmatpush1.bf16.msra.mxu0 %v424
    %539 = vmatprep.subr.bf16.mxu0 0
    %540 = vmatpush1.bf16.msra.mxu0 %v425
    %541 = vmatprep.subr.bf16.mxu0 0
    %542 = vmatpush1.bf16.msra.mxu0 %v426
    %543 = vmatprep.subr.bf16.mxu0 0
    %544 = vmatpush1.bf16.msra.mxu0 %v427
    %545 = vmatprep.subr.bf16.mxu0 0
    %546 = vmatpush1.bf16.msra.mxu0 %v428
    %547 = vmatprep.mubr.bf16.mxu0 %v106
    %548 = vmatmul.mubr.bf16.gmra.mrb[0].mxu0 %v105
    %v549 = vpop.f32.mrb[0].mxu0
    %v550 = vadd.f32 %v215, %v549
    %v551 = vpop.f32.mrb[0].mxu0
    %v552 = vpop.f32.mrb[0].mxu0
    %v553 = vpop.f32.mrb[0].mxu0
    %554 = vdwg.mxu0
    %555 = vmatprep.subr.bf16.mxu0 0
    %556 = vmatpush1.bf16.msra.mxu0 %v429
    %557 = vmatprep.subr.bf16.mxu0 0
    %558 = vmatpush1.bf16.msra.mxu0 %v430
    %559 = vmatprep.subr.bf16.mxu0 0
    %560 = vmatpush1.bf16.msra.mxu0 %v431
    %561 = vmatprep.subr.bf16.mxu0 0
    %562 = vmatpush1.bf16.msra.mxu0 %v432
    %563 = vmatprep.subr.bf16.mxu0 0
    %564 = vmatpush1.bf16.msra.mxu0 %v433
    %565 = vmatprep.subr.bf16.mxu0 0
    %566 = vmatpush1.bf16.msra.mxu0 %v434
    %567 = vmatprep.subr.bf16.mxu0 0
    %568 = vmatpush1.bf16.msra.mxu0 %v435
    %569 = vmatprep.subr.bf16.mxu0 0
    %570 = vmatpush1.bf16.msra.mxu0 %v436
    %571 = vmatprep.subr.bf16.mxu0 0
    %572 = vmatpush1.bf16.msra.mxu0 %v437
    %573 = vmatprep.subr.bf16.mxu0 0
    %574 = vmatpush1.bf16.msra.mxu0 %v438
    %575 = vmatprep.subr.bf16.mxu0 0
    %576 = vmatpush1.bf16.msra.mxu0 %v439
    %577 = vmatprep.subr.bf16.mxu0 0
    %578 = vmatpush1.bf16.msra.mxu0 %v440
    %579 = vmatprep.subr.bf16.mxu0 0
    %580 = vmatpush1.bf16.msra.mxu0 %v441
    %581 = vmatprep.subr.bf16.mxu0 0
    %582 = vmatpush1.bf16.msra.mxu0 %v442
    %583 = vmatprep.subr.bf16.mxu0 0
    %584 = vmatpush1.bf16.msra.mxu0 %v443
    %585 = vmatprep.subr.bf16.mxu0 0
    %586 = vmatpush1.bf16.msra.mxu0 %v444
    %587 = vmatprep.mubr.bf16.mxu0 %v108
    %588 = vmatmul.mubr.bf16.gmra.mrb[0].mxu0 %v107
    %v589 = vpop.f32.mrb[0].mxu0
    %v590 = vadd.f32 %v550, %v589
    %v591 = vpop.f32.mrb[0].mxu0
    %v592 = vpop.f32.mrb[0].mxu0
    %v593 = vpop.f32.mrb[0].mxu0
    %594 = vdwg.mxu0
    %595 = vmatprep.subr.bf16.mxu0 0
    %596 = vmatpush1.bf16.msra.mxu0 %v445
    %597 = vmatprep.subr.bf16.mxu0 0
    %598 = vmatpush1.bf16.msra.mxu0 %v446
    %599 = vmatprep.subr.bf16.mxu0 0
    %600 = vmatpush1.bf16.msra.mxu0 %v447
    %601 = vmatprep.subr.bf16.mxu0 0
    %602 = vmatpush1.bf16.msra.mxu0 %v448
    %603 = vmatprep.subr.bf16.mxu0 0
    %604 = vmatpush1.bf16.msra.mxu0 %v449
    %605 = vmatprep.subr.bf16.mxu0 0
    %606 = vmatpush1.bf16.msra.mxu0 %v450
    %607 = vmatprep.subr.bf16.mxu0 0
    %608 = vmatpush1.bf16.msra.mxu0 %v451
    %609 = vmatprep.subr.bf16.mxu0 0
    %610 = vmatpush1.bf16.msra.mxu0 %v452
    %611 = vmatprep.subr.bf16.mxu0 0
    %612 = vmatpush1.bf16.msra.mxu0 %v453
    %613 = vmatprep.subr.bf16.mxu0 0
    %614 = vmatpush1.bf16.msra.mxu0 %v454
    %615 = vmatprep.subr.bf16.mxu0 0
    %616 = vmatpush1.bf16.msra.mxu0 %v455
    %617 = vmatprep.subr.bf16.mxu0 0
    %618 = vmatpush1.bf16.msra.mxu0 %v456
    %619 = vmatprep.subr.bf16.mxu0 0
    %620 = vmatpush1.bf16.msra.mxu0 %v457
    %621 = vmatprep.subr.bf16.mxu0 0
    %622 = vmatpush1.bf16.msra.mxu0 %v458
    %623 = vmatprep.subr.bf16.mxu0 0
    %624 = vmatpush1.bf16.msra.mxu0 %v459
    %625 = vmatprep.subr.bf16.mxu0 0
    %626 = vmatpush1.bf16.msra.mxu0 %v460
    %627 = vmatprep.mubr.bf16.mxu0 %v110
    %628 = vmatmul.mubr.bf16.gmra.mrb[0].mxu0 %v109
    %v629 = vpop.f32.mrb[0].mxu0
    %v630 = vadd.f32 %v590, %v629
    %v631 = vpop.f32.mrb[0].mxu0
    %v632 = vpop.f32.mrb[0].mxu0
    %v633 = vpop.f32.mrb[0].mxu0
    %634 = vdwg.mxu0
    %635 = vmatprep.subr.bf16.mxu0 0
    %636 = vmatpush1.bf16.msra.mxu0 %v461
    %637 = vmatprep.subr.bf16.mxu0 0
    %638 = vmatpush1.bf16.msra.mxu0 0
    %639 = vmatprep.subr.bf16.mxu0 0
    %640 = vmatpush1.bf16.msra.mxu0 0
    %641 = vmatprep.subr.bf16.mxu0 0
    %642 = vmatpush1.bf16.msra.mxu0 0
    %643 = vmatprep.subr.bf16.mxu0 0
    %644 = vmatpush1.bf16.msra.mxu0 0
    %645 = vmatprep.subr.bf16.mxu0 0
    %646 = vmatpush1.bf16.msra.mxu0 0
    %647 = vmatprep.subr.bf16.mxu0 0
    %648 = vmatpush1.bf16.msra.mxu0 0
    %649 = vmatprep.subr.bf16.mxu0 0
    %650 = vmatpush1.bf16.msra.mxu0 0
    %651 = vmatprep.subr.bf16.mxu0 0
    %652 = vmatpush1.bf16.msra.mxu0 0
    %653 = vmatprep.subr.bf16.mxu0 0
    %654 = vmatpush1.bf16.msra.mxu0 0
    %655 = vmatprep.subr.bf16.mxu0 0
    %656 = vmatpush1.bf16.msra.mxu0 0
    %657 = vmatprep.subr.bf16.mxu0 0
    %658 = vmatpush1.bf16.msra.mxu0 0
    %659 = vmatprep.subr.bf16.mxu0 0
    %660 = vmatpush1.bf16.msra.mxu0 0
    %661 = vmatprep.subr.bf16.mxu0 0
    %662 = vmatpush1.bf16.msra.mxu0 0
    %663 = vmatprep.subr.bf16.mxu0 0
    %664 = vmatpush1.bf16.msra.mxu0 0
    %665 = vmatprep.subr.bf16.mxu0 0
    %666 = vmatpush1.bf16.msra.mxu0 0
    %667 = vmatprep.mubr.bf16.mxu0 0
    %668 = vmatmul.mubr.bf16.gmra.mrb[0].mxu0 %v513
    %v669 = vpop.f32.mrb[0].mxu0
    %v670 = vadd.f32 %v630, %v669
    %v671 = vpop.f32.mrb[0].mxu0
    %v672 = vpop.f32.mrb[0].mxu0
    %v673 = vpop.f32.mrb[0].mxu0
    %674 = vdwg.mxu0
    %v675 = vmax.f32 %v670, 0.0
    %v676 = vld [vmem:[#allocation7] sm:$0xff]
    %v677 = vld [vmem:[#allocation7 + $0x8] sm:$0xff]
    %v678 = vld [vmem:[#allocation7 + $0x10] sm:$0xff]
    %v679 = vld [vmem:[#allocation7 + $0x18] sm:$0xff]
    %v680 = vld [vmem:[#allocation7 + $0x20] sm:$0xff]
    %v681 = vld [vmem:[#allocation7 + $0x28] sm:$0xff]
    %v682 = vld [vmem:[#allocation7 + $0x30] sm:$0xff]
    %v683 = vld [vmem:[#allocation7 + $0x38] sm:$0xff]
    %v684 = vld [vmem:[#allocation7 + $0x40] sm:$0xff]
    %v685 = vld [vmem:[#allocation7 + $0x48] sm:$0xff]
    %v686 = vld [vmem:[#allocation7 + $0x50] sm:$0xff]
    %v687 = vld [vmem:[#allocation7 + $0x58] sm:$0xff]
    %v688 = vld [vmem:[#allocation7 + $0x60] sm:$0xff]
    %v689 = vld [vmem:[#allocation7 + $0x68] sm:$0xff]
    %v690 = vld [vmem:[#allocation7 + $0x70] sm:$0xff]
    %v691 = vld [vmem:[#allocation7 + $0x78] sm:$0xff]
    %v692 = vld [vmem:[%s4] sm:$0x1]
    %v694 = vlaneseq
    %v695 = vshrl.u32 %v694, 7
    %v696 = vsub.s32 0, %v695
    %v697 = vrot.slane %v692, %v696
    %699 = vmatprep.subr.mxu0 0.0
    %700 = vmatpush1.msra.mxu0 %v676
    %701 = vmatprep.subr.mxu0 0.0
    %702 = vmatpush1.msra.mxu0 %v677
    %703 = vmatprep.subr.mxu0 0.0
    %704 = vmatpush1.msra.mxu0 %v678
    %705 = vmatprep.subr.mxu0 0.0
    %706 = vmatpush1.msra.mxu0 %v679
    %707 = vmatprep.subr.mxu0 0.0
    %708 = vmatpush1.msra.mxu0 %v680
    %709 = vmatprep.subr.mxu0 0.0
    %710 = vmatpush1.msra.mxu0 %v681
    %711 = vmatprep.subr.mxu0 0.0
    %712 = vmatpush1.msra.mxu0 %v682
    %713 = vmatprep.subr.mxu0 0.0
    %714 = vmatpush1.msra.mxu0 %v683
    %715 = vmatprep.subr.mxu0 0.0
    %716 = vmatpush1.msra.mxu0 %v684
    %717 = vmatprep.subr.mxu0 0.0
    %718 = vmatpush1.msra.mxu0 %v685
    %719 = vmatprep.subr.mxu0 0.0
    %720 = vmatpush1.msra.mxu0 %v686
    %721 = vmatprep.subr.mxu0 0.0
    %722 = vmatpush1.msra.mxu0 %v687
    %723 = vmatprep.subr.mxu0 0.0
    %724 = vmatpush1.msra.mxu0 %v688
    %725 = vmatprep.subr.mxu0 0.0
    %726 = vmatpush1.msra.mxu0 %v689
    %727 = vmatprep.subr.mxu0 0.0
    %728 = vmatpush1.msra.mxu0 %v690
    %729 = vmatprep.subr.mxu0 0.0
    %730 = vmatpush1.msra.mxu0 %v691
    %731 = vmatprep.subr.mxu0 0.0
    %732 = vmatpush1.msra.mxu0 0.0
    %733 = vmatprep.subr.mxu0 0.0
    %734 = vmatpush1.msra.mxu0 0.0
    %735 = vmatprep.subr.mxu0 0.0
    %736 = vmatpush1.msra.mxu0 0.0
    %737 = vmatprep.subr.mxu0 0.0
    %738 = vmatpush1.msra.mxu0 0.0
    %739 = vmatprep.subr.mxu0 0.0
    %740 = vmatpush1.msra.mxu0 0.0
    %741 = vmatprep.subr.mxu0 0.0
    %742 = vmatpush1.msra.mxu0 0.0
    %743 = vmatprep.subr.mxu0 0.0
    %744 = vmatpush1.msra.mxu0 0.0
    %745 = vmatprep.subr.mxu0 0.0
    %746 = vmatpush1.msra.mxu0 0.0
    %747 = vmatprep.subr.mxu0 0.0
    %748 = vmatpush1.msra.mxu0 0.0
    %749 = vmatprep.subr.mxu0 0.0
    %750 = vmatpush1.msra.mxu0 0.0
    %751 = vmatprep.subr.mxu0 0.0
    %752 = vmatpush1.msra.mxu0 0.0
    %753 = vmatprep.subr.mxu0 0.0
    %754 = vmatpush1.msra.mxu0 0.0
    %755 = vmatprep.subr.mxu0 0.0
    %756 = vmatpush1.msra.mxu0 0.0
    %757 = vmatprep.subr.mxu0 0.0
    %758 = vmatpush1.msra.mxu0 0.0
    %759 = vmatprep.subr.mxu0 0.0
    %760 = vmatpush1.msra.mxu0 0.0
    %761 = vmatprep.subr.mxu0 0.0
    %762 = vmatpush1.msra.mxu0 0.0
    %763 = vmatprep.mubr.f32.mxu0 0.0
    %764 = vmatmul.mubr.f32.gmra.mrb[0].mxu0 %v675
    %v765 = vpop.f32.mrb[0].mxu0
    %v766 = vadd.f32 %v697, %v765
    %v767 = vpop.f32.mrb[0].mxu0
    %768 = vdwg.mxu0
    %vm769 = vcmask 1041408
    %v770 = vsel %vm769, %v766, -inf
    %771 = vmax.xlane.f32.xlu0 %v770
    %v772 = vpop.xlane.xlu0 %771
    %v773 = vsub.f32 %v766, %v772
    %v774 = vmul.f32 %v773, 1.442695
    %v775 = vpow.pop %v774
    %v776 = vsel %vm769, %v775, 0.0
    %777 = vadd.xlane.f32.xlu0 %v776
    %v778 = vpop.xlane.xlu0 %777
    %v779 = vrcp.pop %v778
    %v780 = vmul.f32 %v775, %v779
    %781 = vst [vmem:[#allocation8] sm:$0x3] %v780
    // Predicated region
    $region34: #{tpu_custom_call.1} parent=1 // pred_check
      _
    $region35: #{tpu_custom_call.1} parent=1 // pred_check_branch
      %783 = sbr.rel (0) target = $region37
    $region36: #{tpu_custom_call.1} parent=1 // pred_region
      %s785 = ssub.s32 32, 32
      %786 = vsyncadd [#allocation4], %s785
      %s788 = sshll.u32 [#allocation8], 4
      %s789 = int_to_ptr.vmem [resolvable:$true] %s788
      %791 = dma.vmem_to_hbm [thread:$0]  %s789, 32, %s5, [#allocation4]
    $region37: #{tpu_custom_call.1} parent=1 // pred_fallthru
      _
    // Predicated region
    $region38: #{tpu_custom_call.1} parent=1 // pred_check
      _
    $region39: #{tpu_custom_call.1} parent=1 // pred_check_branch
      %793 = sbr.rel (0) target = $region41
    $region40: #{tpu_custom_call.1} parent=1 // pred_region
      %794 = dma.done [#allocation4], 32
    $region41: #{tpu_custom_call.1} parent=1 // pred_fallthru
      _
    %795 = vsyncpa [#allocation3], 1
    %796 = vsyncpa [#allocation6], 1
    %797 = vsyncpa [#allocation4], 1

</llo_original>
